<compile_context>
chip_gen: v7x
topology: tpu7x:2x2x1
jax: 0.10.0
libtpu: 0.0.40
codegen_flags: <defaults>
</compile_context>

<pallas_src>
import functools
from dataclasses import dataclass

import jax
import jax.numpy as jnp
from jax.experimental import pallas as pl
from jax.experimental.pallas import tpu as pltpu


# ----------------------------------------------------------------------------- helpers
@dataclass
class ModelOutput:
    """Minimal stand-in for terratorch's ModelOutput container."""
    output: jax.Array


def _round_up(x: int, m: int) -> int:
    return ((x + m - 1) // m) * m


_SQRT_2_OVER_PI = 0.7978845608028654


def _gelu_tanh(x):
    # tanh-approximate GELU (transcendental lands on the EUP slot).
    # TODO(synk): torch.nn.GELU default is the exact erf form; the tanh approx
    # differs by <1e-3 — the in-script reference uses the same formula.
    return 0.5 * x * (1.0 + jnp.tanh(_SQRT_2_OVER_PI * (x + 0.044715 * x * x * x)))


# ----------------------------------------------------------------------------- kernel
def _fused_patch_mlp_kernel(x_ref, w1_ref, b1_ref, w2_ref, b2_ref, o_ref):
    """One M-tile of: (x @ W_patch + b_patch) -> GELU -> (@ W_head + b_head)."""
    # Patch-embed matmul (Conv2d with kernel==stride): bf16 MXU, f32 accumulation.
    h = jnp.dot(x_ref[...], w1_ref[...], preferred_element_type=jnp.float32)
    h = _gelu_tanh(h + b1_ref[...])          # (1, Ep) bias broadcasts over (tm, Ep); f32

    # Head matmul: bf16 into the MXU, f32 accumulation.  The hidden tile never
    # touches VMEM scratch — it flows value->cast->MXU within this grid step.
    y = jnp.dot(h.astype(jnp.bfloat16), w2_ref[...],
                preferred_element_type=jnp.float32)
    o_ref[...] = (y + b2_ref[...]).astype(o_ref.dtype)   # single lane-dense store


# ----------------------------------------------------------------------------- wrapper
def wxc_patch_mlp_forward(x_nchw, *, conv_w, conv_b, head_w, head_b, patch, tm=256):
    """Fused forward of the representative inner WxC module.

    x_nchw : [B, C, H, W] float32
    conv_w : [E, C, p, p]  (torch Conv2d weight layout)
    conv_b : [E]
    head_w : [O, E]        (torch Linear weight layout)
    head_b : [O]
    returns: [B, Np, O] float32 patch-token features
    """
    B, C, H, W = x_nchw.shape
    E = conv_w.shape[0]
    O = head_w.shape[0]
    p = patch
    nh, nw = H // p, W // p
    M = B * nh * nw
    K = C * p * p

    # --- host-side im2col with (c, ki, kj) ordering (matches conv_w.reshape(E, C*p*p))
    xp = x_nchw.reshape(B, C, nh, p, nw, p)
    xp = jnp.transpose(xp, (0, 2, 4, 1, 3, 5))           # [B, nh, nw, C, p, p]
    x2d = xp.reshape(M, K)

    w1 = conv_w.reshape(E, K).T                          # [K, E]
    w2 = head_w.T                                        # [E, O]

    # --- pad to lane/sublane-aligned shapes (zero-fill so padding contributes 0)
    Kp = _round_up(K, 128)
    Ep = _round_up(E, 128)
    Op = _round_up(O, 128)
    tm = min(tm, _round_up(M, 8))                        # don't over-tile tiny M
    Mp = _round_up(M, tm)

    x2d_p = jnp.zeros((Mp, Kp), jnp.bfloat16).at[:M, :K].set(x2d.astype(jnp.bfloat16))
    w1_p = jnp.zeros((Kp, Ep), jnp.bfloat16).at[:K, :E].set(w1.astype(jnp.bfloat16))
    b1_p = jnp.zeros((1, Ep), jnp.float32).at[:, :E].set(conv_b.astype(jnp.float32)[None, :])
    w2_p = jnp.zeros((Ep, Op), jnp.bfloat16).at[:E, :O].set(w2.astype(jnp.bfloat16))
    b2_p = jnp.zeros((1, Op), jnp.float32).at[:, :O].set(head_b.astype(jnp.float32)[None, :])

    grid = (Mp // tm,)

    out = pl.pallas_call(
        _fused_patch_mlp_kernel,
        out_shape=jax.ShapeDtypeStruct((Mp, Op), jnp.float32),
        grid_spec=pltpu.PrefetchScalarGridSpec(
            num_scalar_prefetch=0,
            grid=grid,
            in_specs=[
                pl.BlockSpec((tm, Kp), lambda i: (i, 0)),   # x tile: streamed over M
                pl.BlockSpec((Kp, Ep), lambda i: (0, 0)),   # W_patch: VMEM-resident
                pl.BlockSpec((1, Ep),  lambda i: (0, 0)),   # b_patch: VMEM-resident
                pl.BlockSpec((Ep, Op), lambda i: (0, 0)),   # W_head : VMEM-resident
                pl.BlockSpec((1, Op),  lambda i: (0, 0)),   # b_head : VMEM-resident
            ],
            out_specs=pl.BlockSpec((tm, Op), lambda i: (i, 0)),
        ),
        compiler_params=pltpu.CompilerParams(
            dimension_semantics=("parallel",),               # shard M across TCs (v7x)
            vmem_limit_bytes=48 * 1024 * 1024,               # headroom under v7x's 64 MiB
        ),
    )(x2d_p, w1_p, b1_p, w2_p, b2_p)

    return out[:M, :O].reshape(B, nh * nw, O)


class WxCModuleWrapperPallas:
    """Pallas analogue of terratorch's WxCModuleWrapper: forward(x) = ModelOutput(module(x))."""

    def __init__(self, module_fn):
        self.module = module_fn

    def freeze_encoder(self):
        raise NotImplementedError("This function is not yet implemented.")

    def freeze_decoder(self):
        raise NotImplementedError("This function is not yet implemented.")

    def forward(self, x) -> ModelOutput:
        return ModelOutput(self.module(x))

    # TODO(synk): load_state_dict is a torch checkpoint-IO utility with no Pallas
    # equivalent; parameters are passed explicitly to the module function instead.


# ----------------------------------------------------------------------------- main
if __name__ == "__main__":
    key = jax.random.PRNGKey(0)
    B, C, H, W = 2, 4, 16, 16
    p, E, O = 4, 32, 8

    k1, k2, k3, k4, k5 = jax.random.split(key, 5)
    x = jax.random.normal(k1, (B, C, H, W), jnp.float32)
    conv_w = 0.05 * jax.random.normal(k2, (E, C, p, p), jnp.float32)
    conv_b = 0.05 * jax.random.normal(k3, (E,), jnp.float32)
    head_w = 0.05 * jax.random.normal(k4, (O, E), jnp.float32)
    head_b = 0.05 * jax.random.normal(k5, (O,), jnp.float32)

    inner = functools.partial(
        wxc_patch_mlp_forward,
        conv_w=conv_w, conv_b=conv_b, head_w=head_w, head_b=head_b, patch=p,
    )
    wrapper = WxCModuleWrapperPallas(inner)

    mo = wrapper.forward(x)
    y = jax.block_until_ready(mo.output)

    # Pure-JAX f32 reference (same conv-as-matmul + tanh-GELU + head).
    nh, nw = H // p, W // p
    x2d = (x.reshape(B, C, nh, p, nw, p)
             .transpose(0, 2, 4, 1, 3, 5)
             .reshape(B * nh * nw, C * p * p))
    h_ref = _gelu_tanh(x2d @ conv_w.reshape(E, -1).T + conv_b)
    y_ref = (h_ref @ head_w.T + head_b).reshape(B, nh * nw, O)

    assert y.shape == (B, nh * nw, O), f"bad output shape {y.shape}"
    max_err = float(jnp.max(jnp.abs(y - y_ref)))
    if not jnp.allclose(y, y_ref, atol=3e-2, rtol=3e-2):
        raise AssertionError(f"Pallas output mismatch vs reference, max abs err = {max_err}")

    print("KERNEL_OK")
</pallas_src>

<mosaic_0001>
module attributes {stable_mosaic.version = 11 : i64} {
  func.func @_fused_patch_mlp_kernel(%arg0: i32, %arg1: memref<32x128xbf16, #tpu.memory_space<vmem>>, %arg2: memref<128x128xbf16, #tpu.memory_space<vmem>>, %arg3: memref<1x128xf32, #tpu.memory_space<vmem>>, %arg4: memref<128x128xbf16, #tpu.memory_space<vmem>>, %arg5: memref<1x128xf32, #tpu.memory_space<vmem>>, %arg6: memref<32x128xf32, #tpu.memory_space<vmem>>) attributes {dimension_semantics = [#tpu.dimension_semantics<parallel>], iteration_bounds = array<i64: 1>, scalar_prefetch = 0 : i64, scratch_operands = 0 : i64, tpu.core_type = #tpu.core_type<tc>, window_params = [{transform_indices = @transform_0, window_bounds = array<i64: 32, 128>}, {pipeline_mode = #tpu.pipeline_mode<synchronous>, transform_indices = @transform_1, window_bounds = array<i64: 128, 128>}, {pipeline_mode = #tpu.pipeline_mode<synchronous>, transform_indices = @transform_2, window_bounds = array<i64: 1, 128>}, {pipeline_mode = #tpu.pipeline_mode<synchronous>, transform_indices = @transform_3, window_bounds = array<i64: 128, 128>}, {pipeline_mode = #tpu.pipeline_mode<synchronous>, transform_indices = @transform_4, window_bounds = array<i64: 1, 128>}, {transform_indices = @transform_5, window_bounds = array<i64: 32, 128>}]} {
    %c0 = arith.constant 0 : index
    %c0_0 = arith.constant 0 : index
    %0 = vector.load %arg1[%c0, %c0_0] : memref<32x128xbf16, #tpu.memory_space<vmem>>, vector<32x128xbf16>
    %c0_1 = arith.constant 0 : index
    %c0_2 = arith.constant 0 : index
    %1 = vector.load %arg2[%c0_1, %c0_2] : memref<128x128xbf16, #tpu.memory_space<vmem>>, vector<128x128xbf16>
    %cst = arith.constant dense<0.000000e+00> : vector<32x128xf32>
    %2 = tpu.matmul %0, %1, %cst {dimension_numbers = #tpu.dot_dimension_numbers<[1], [0], [0], [1], [0, 0, 1, 1], [], []>} : vector<32x128xbf16>, vector<128x128xbf16>, vector<32x128xf32> -> vector<32x128xf32>
    %c0_3 = arith.constant 0 : index
    %c0_4 = arith.constant 0 : index
    %3 = vector.load %arg3[%c0_3, %c0_4] : memref<1x128xf32, #tpu.memory_space<vmem>>, vector<1x128xf32>
    %4 = vector.broadcast %3 : vector<1x128xf32> to vector<32x128xf32>
    %5 = arith.addf %2, %4 : vector<32x128xf32>
    %cst_5 = arith.constant 5.000000e-01 : f32
    %6 = vector.broadcast %cst_5 : f32 to vector<32x128xf32>
    %7 = arith.mulf %6, %5 : vector<32x128xf32>
    %cst_6 = arith.constant 4.471500e-02 : f32
    %8 = vector.broadcast %cst_6 : f32 to vector<32x128xf32>
    %9 = arith.mulf %8, %5 : vector<32x128xf32>
    %10 = arith.mulf %9, %5 : vector<32x128xf32>
    %11 = arith.mulf %10, %5 : vector<32x128xf32>
    %12 = arith.addf %5, %11 : vector<32x128xf32>
    %cst_7 = arith.constant 0.797884583 : f32
    %13 = vector.broadcast %cst_7 : f32 to vector<32x128xf32>
    %14 = arith.mulf %13, %12 : vector<32x128xf32>
    %15 = math.tanh %14 : vector<32x128xf32>
    %cst_8 = arith.constant 1.000000e+00 : f32
    %16 = vector.broadcast %cst_8 : f32 to vector<32x128xf32>
    %17 = arith.addf %16, %15 : vector<32x128xf32>
    %18 = arith.mulf %7, %17 : vector<32x128xf32>
    %19 = arith.truncf %18 : vector<32x128xf32> to vector<32x128xbf16>
    %c0_9 = arith.constant 0 : index
    %c0_10 = arith.constant 0 : index
    %20 = vector.load %arg4[%c0_9, %c0_10] : memref<128x128xbf16, #tpu.memory_space<vmem>>, vector<128x128xbf16>
    %cst_11 = arith.constant dense<0.000000e+00> : vector<32x128xf32>
    %21 = tpu.matmul %19, %20, %cst_11 {dimension_numbers = #tpu.dot_dimension_numbers<[1], [0], [0], [1], [0, 0, 1, 1], [], []>} : vector<32x128xbf16>, vector<128x128xbf16>, vector<32x128xf32> -> vector<32x128xf32>
    %c0_12 = arith.constant 0 : index
    %c0_13 = arith.constant 0 : index
    %22 = vector.load %arg5[%c0_12, %c0_13] : memref<1x128xf32, #tpu.memory_space<vmem>>, vector<1x128xf32>
    %23 = vector.broadcast %22 : vector<1x128xf32> to vector<32x128xf32>
    %24 = arith.addf %21, %23 : vector<32x128xf32>
    %c0_14 = arith.constant 0 : index
    %c0_15 = arith.constant 0 : index
    %25 = vector.load %arg6[%c0_14, %c0_15] : memref<32x128xf32, #tpu.memory_space<vmem>>, vector<32x128xf32>
    tpu.vector_store %arg6[%c0_14, %c0_15], %24 {strides = array<i32>} : memref<32x128xf32, #tpu.memory_space<vmem>>, vector<32x128xf32>,
    return
  }
  func.func @transform_0(%arg0: i32) -> (i32, i32) {
    %c0_i32 = arith.constant 0 : i32
    %c0_i32_0 = arith.constant 0 : i32
    return %arg0, %c0_i32 : i32, i32
  }
  func.func @transform_1(%arg0: i32) -> (i32, i32) {
    %c0_i32 = arith.constant 0 : i32
    %c0_i32_0 = arith.constant 0 : i32
    %c0_i32_1 = arith.constant 0 : i32
    return %c0_i32, %c0_i32_0 : i32, i32
  }
  func.func @transform_2(%arg0: i32) -> (i32, i32) {
    %c0_i32 = arith.constant 0 : i32
    %c0_i32_0 = arith.constant 0 : i32
    %c0_i32_1 = arith.constant 0 : i32
    return %c0_i32, %c0_i32_0 : i32, i32
  }
  func.func @transform_3(%arg0: i32) -> (i32, i32) {
    %c0_i32 = arith.constant 0 : i32
    %c0_i32_0 = arith.constant 0 : i32
    %c0_i32_1 = arith.constant 0 : i32
    return %c0_i32, %c0_i32_0 : i32, i32
  }
  func.func @transform_4(%arg0: i32) -> (i32, i32) {
    %c0_i32 = arith.constant 0 : i32
    %c0_i32_0 = arith.constant 0 : i32
    %c0_i32_1 = arith.constant 0 : i32
    return %c0_i32, %c0_i32_0 : i32, i32
  }
  func.func @transform_5(%arg0: i32) -> (i32, i32) {
    %c0_i32 = arith.constant 0 : i32
    %c0_i32_0 = arith.constant 0 : i32
    return %arg0, %c0_i32 : i32, i32
  }
}

</mosaic_0001>

<llo_original>
// kernel: tpu_custom_call.1
$region0: #{tpu_custom_call.1}
  #allocation0 [shape = 'u32[]', space=smem, size = 0x4, offset = 0x4, fixed_abs, tag = 'smem constant byte address 0x4 - core index']
  #allocation1 [shape = 'u32[144,128]{1,0:T(1,128)}', space=vmem, size = 0x12000, scoped, tag = 'internal scratch']
  %s0 = inlined_call_operand.hbm [shape: bf16[32,128], index: 0, kind: input, shape index: {}]
  %s1 = inlined_call_operand.hbm [shape: bf16[128,128], index: 1, kind: input, shape index: {}]
  %s2 = inlined_call_operand.vmem [shape: f32[1,128], index: 2, kind: input, shape index: {}]
  %s3 = inlined_call_operand.hbm [shape: bf16[128,128], index: 3, kind: input, shape index: {}]
  %s4 = inlined_call_operand.vmem [shape: f32[1,128], index: 4, kind: input, shape index: {}]
  %s5 = inlined_call_operand.hbm [shape: f32[32,128], index: 5, kind: output, shape index: {}]
  %s6 = sld [smem:[#allocation0]]
  $region42: #{tpu_custom_call.1} parent=0
    _
  %s8 = ssub.s32 1, %s6
  %s9 = scalar_select 0, %s8, %s6
  $region1: #{tpu_custom_call.1} parent=0
    #allocation2 [shape = 'u8[8192]{0}', space=vmem, size = 0x2000, scoped, tag = 'input window, operand 0, single buffered']
    #allocation3 [shape = 's32[1]{0}', space=sflag, size = 0x4, scoped, tag = 'scoped memory for tpu_custom_call.1']
    #allocation4 [shape = 's32[1]{0}', space=sflag, size = 0x4, scoped, tag = 'scoped memory for tpu_custom_call.1']
    #allocation5 [shape = 'u8[32768]{0}', space=vmem, size = 0x8000, scoped, tag = 'input window, operand 1, single buffered']
    #allocation6 [shape = 's32[1]{0}', space=sflag, size = 0x4, scoped, tag = 'scoped memory for tpu_custom_call.1']
    #allocation7 [shape = 'u8[32768]{0}', space=vmem, size = 0x8000, scoped, tag = 'input window, operand 3, single buffered']
    #allocation8 [shape = 'u8[16384]{0}', space=vmem, size = 0x4000, scoped, tag = 'output window, operand 0, single buffered']
    %10 = vsyncpa [#allocation3], 0
    %11 = vsyncpa [#allocation6], 0
    %12 = vsyncpa [#allocation4], 0
    // Predicated region
    $region2: #{tpu_custom_call.1} parent=1 // pred_check
      _
    $region3: #{tpu_custom_call.1} parent=1 // pred_check_branch
      %14 = sbr.rel (0) target = $region5
    $region4: #{tpu_custom_call.1} parent=1 // pred_region
      %s16 = ssub.s32 256, 256
      %17 = vsyncadd [#allocation3], %s16
      %s18 = sshll.u32 [#allocation2], 4
      %s19 = int_to_ptr.vmem [resolvable:$true] %s18
      %24 = dma.hbm_to_vmem [thread:$0]  %s0, 256, %s19, [#allocation3], 64, 64, 4
    $region5: #{tpu_custom_call.1} parent=1 // pred_fallthru
      _
    // Predicated region
    $region6: #{tpu_custom_call.1} parent=1 // pred_check
      _
    $region7: #{tpu_custom_call.1} parent=1 // pred_check_branch
      %26 = sbr.rel (0) target = $region9
    $region8: #{tpu_custom_call.1} parent=1 // pred_region
      %s28 = ssub.s32 1024, 1024
      %29 = vsyncadd [#allocation6], %s28
      %s30 = sshll.u32 [#allocation5], 4
      %s31 = int_to_ptr.vmem [resolvable:$true] %s30
      %36 = dma.hbm_to_vmem [thread:$0]  %s1, 1024, %s31, [#allocation6], 64, 64, 4
    $region9: #{tpu_custom_call.1} parent=1 // pred_fallthru
      _
    // Predicated region
    $region10: #{tpu_custom_call.1} parent=1 // pred_check
      _
    $region11: #{tpu_custom_call.1} parent=1 // pred_check_branch
      %38 = sbr.rel (0) target = $region13
    $region12: #{tpu_custom_call.1} parent=1 // pred_region
      _
    $region13: #{tpu_custom_call.1} parent=1 // pred_fallthru
      _
    // Predicated region
    $region14: #{tpu_custom_call.1} parent=1 // pred_check
      _
    $region15: #{tpu_custom_call.1} parent=1 // pred_check_branch
      %40 = sbr.rel (0) target = $region17
    $region16: #{tpu_custom_call.1} parent=1 // pred_region
      %s42 = ssub.s32 1024, 1024
      %43 = vsyncadd [#allocation6], %s42
      %s44 = sshll.u32 [#allocation7], 4
      %s45 = int_to_ptr.vmem [resolvable:$true] %s44
      %50 = dma.hbm_to_vmem [thread:$0]  %s3, 1024, %s45, [#allocation6], 64, 64, 4
    $region17: #{tpu_custom_call.1} parent=1 // pred_fallthru
      _
    // Predicated region
    $region18: #{tpu_custom_call.1} parent=1 // pred_check
      _
    $region19: #{tpu_custom_call.1} parent=1 // pred_check_branch
      %52 = sbr.rel (0) target = $region21
    $region20: #{tpu_custom_call.1} parent=1 // pred_region
      _
    $region21: #{tpu_custom_call.1} parent=1 // pred_fallthru
      _
    // Predicated region
    $region22: #{tpu_custom_call.1} parent=1 // pred_check
      _
    $region23: #{tpu_custom_call.1} parent=1 // pred_check_branch
      %54 = sbr.rel (0) target = $region25
    $region24: #{tpu_custom_call.1} parent=1 // pred_region
      %55 = dma.done [#allocation3], 256
    $region25: #{tpu_custom_call.1} parent=1 // pred_fallthru
      _
    // Predicated region
    $region26: #{tpu_custom_call.1} parent=1 // pred_check
      _
    $region27: #{tpu_custom_call.1} parent=1 // pred_check_branch
      %57 = sbr.rel (0) target = $region29
    $region28: #{tpu_custom_call.1} parent=1 // pred_region
      %58 = dma.done [#allocation6], 1024
    $region29: #{tpu_custom_call.1} parent=1 // pred_fallthru
      _
    // Predicated region
    $region30: #{tpu_custom_call.1} parent=1 // pred_check
      _
    $region31: #{tpu_custom_call.1} parent=1 // pred_check_branch
      %60 = sbr.rel (0) target = $region33
    $region32: #{tpu_custom_call.1} parent=1 // pred_region
      %61 = dma.done [#allocation6], 1024
    $region33: #{tpu_custom_call.1} parent=1 // pred_fallthru
      _
    %v63 = vld [vmem:[#allocation2] sm:$0xf]
    %v64 = vld [vmem:[#allocation2 + $0x4] sm:$0xf]
    %v65 = vld [vmem:[#allocation2 + $0x8] sm:$0xf]
    %v66 = vld [vmem:[#allocation2 + $0xc] sm:$0xf]
    %v67 = vld [vmem:[#allocation5] sm:$0xf]
    %v68 = vld [vmem:[#allocation5 + $0x4] sm:$0xf]
    %v69 = vld [vmem:[#allocation5 + $0x8] sm:$0xf]
    %v70 = vld [vmem:[#allocation5 + $0xc] sm:$0xf]
    %v71 = vld [vmem:[#allocation5 + $0x10] sm:$0xf]
    %v72 = vld [vmem:[#allocation5 + $0x14] sm:$0xf]
    %v73 = vld [vmem:[#allocation5 + $0x18] sm:$0xf]
    %v74 = vld [vmem:[#allocation5 + $0x1c] sm:$0xf]
    %v75 = vld [vmem:[#allocation5 + $0x20] sm:$0xf]
    %v76 = vld [vmem:[#allocation5 + $0x24] sm:$0xf]
    %v77 = vld [vmem:[#allocation5 + $0x28] sm:$0xf]
    %v78 = vld [vmem:[#allocation5 + $0x2c] sm:$0xf]
    %v79 = vld [vmem:[#allocation5 + $0x30] sm:$0xf]
    %v80 = vld [vmem:[#allocation5 + $0x34] sm:$0xf]
    %v81 = vld [vmem:[#allocation5 + $0x38] sm:$0xf]
    %v82 = vld [vmem:[#allocation5 + $0x3c] sm:$0xf]
    %v83 = vld [vmem:[%s2] sm:$0x1]
    %v85 = vlaneseq
    %v86 = vshrl.u32 %v85, 7
    %v87 = vsub.s32 0, %v86
    %v88 = vrot.slane %v83, %v87
    %v94 = vunpack.c.l.b16 %v63
    %v95 = vunpack.c.l.b16 %v64
    %v96 = vunpack.c.l.b16 %v65
    %v97 = vunpack.c.l.b16 %v66
    %v98 = vpack.c.b16 %v95, %v94
    %v99 = vpack.c.b16 %v97, %v96
    %v118 = vunpack.c.l.b16 %v67
    %v119 = vunpack.c.l.b16 %v68
    %v120 = vunpack.c.l.b16 %v69
    %v121 = vunpack.c.l.b16 %v70
    %v122 = vunpack.c.l.b16 %v71
    %v123 = vunpack.c.l.b16 %v72
    %v124 = vunpack.c.l.b16 %v73
    %v125 = vunpack.c.l.b16 %v74
    %v126 = vunpack.c.l.b16 %v75
    %v127 = vunpack.c.l.b16 %v76
    %v128 = vunpack.c.l.b16 %v77
    %v129 = vunpack.c.l.b16 %v78
    %v130 = vunpack.c.l.b16 %v79
    %v131 = vunpack.c.l.b16 %v80
    %v132 = vunpack.c.l.b16 %v81
    %v133 = vunpack.c.l.b16 %v82
    %v134 = vpack.c.b16 %v119, %v118
    %v135 = vpack.c.b16 %v121, %v120
    %v136 = vpack.c.b16 %v123, %v122
    %v137 = vpack.c.b16 %v125, %v124
    %v138 = vpack.c.b16 %v127, %v126
    %v139 = vpack.c.b16 %v129, %v128
    %v140 = vpack.c.b16 %v131, %v130
    %v141 = vpack.c.b16 %v133, %v132
    %150 = vmatprep.subr.bf16.mxu0 0
    %151 = vmatpush1.bf16.msra.mxu0 %v134
    %152 = vmatprep.subr.bf16.mxu0 0
    %153 = vmatpush1.bf16.msra.mxu0 %v135
    %154 = vmatprep.subr.bf16.mxu0 0
    %155 = vmatpush1.bf16.msra.mxu0 %v136
    %156 = vmatprep.subr.bf16.mxu0 0
    %157 = vmatpush1.bf16.msra.mxu0 %v137
    %158 = vmatprep.subr.bf16.mxu0 0
    %159 = vmatpush1.bf16.msra.mxu0 %v138
    %160 = vmatprep.subr.bf16.mxu0 0
    %161 = vmatpush1.bf16.msra.mxu0 %v139
    %162 = vmatprep.subr.bf16.mxu0 0
    %163 = vmatpush1.bf16.msra.mxu0 %v140
    %164 = vmatprep.subr.bf16.mxu0 0
    %165 = vmatpush1.bf16.msra.mxu0 %v141
    %166 = vmatprep.subr.bf16.mxu0 0
    %167 = vmatpush1.bf16.msra.mxu0 0
    %168 = vmatprep.subr.bf16.mxu0 0
    %169 = vmatpush1.bf16.msra.mxu0 0
    %170 = vmatprep.subr.bf16.mxu0 0
    %171 = vmatpush1.bf16.msra.mxu0 0
    %172 = vmatprep.subr.bf16.mxu0 0
    %173 = vmatpush1.bf16.msra.mxu0 0
    %174 = vmatprep.subr.bf16.mxu0 0
    %175 = vmatpush1.bf16.msra.mxu0 0
    %176 = vmatprep.subr.bf16.mxu0 0
    %177 = vmatpush1.bf16.msra.mxu0 0
    %178 = vmatprep.subr.bf16.mxu0 0
    %179 = vmatpush1.bf16.msra.mxu0 0
    %180 = vmatprep.subr.bf16.mxu0 0
    %181 = vmatpush1.bf16.msra.mxu0 0
    %182 = vmatprep.mubr.bf16.mxu0 0
    %183 = vmatmul.mubr.bf16.gmra.mrb[0].mxu0 %v98
    %v184 = vpop.f32.mrb[0].mxu0
    %v185 = vadd.f32 %v88, %v184
    %v186 = vpop.f32.mrb[0].mxu0
    %v187 = vpop.f32.mrb[0].mxu0
    %v188 = vadd.f32 %v88, %v187
    %v189 = vpop.f32.mrb[0].mxu0
    %190 = vmatprep.mubr.bf16.mxu0 0
    %191 = vmatmul.mubr.bf16.gmra.mrb[0].mxu0 %v99
    %v192 = vpop.f32.mrb[0].mxu0
    %v193 = vadd.f32 %v88, %v192
    %v194 = vpop.f32.mrb[0].mxu0
    %v195 = vpop.f32.mrb[0].mxu0
    %v196 = vadd.f32 %v88, %v195
    %v197 = vpop.f32.mrb[0].mxu0
    %198 = vdwg.mxu0
    %v199 = vmul.f32 %v185, 0.5
    %v200 = vmul.f32 %v188, 0.5
    %v201 = vmul.f32 %v193, 0.5
    %v202 = vmul.f32 %v196, 0.5
    %v203 = vmul.f32 %v185, 0.044715
    %v204 = vmul.f32 %v188, 0.044715
    %v205 = vmul.f32 %v193, 0.044715
    %v206 = vmul.f32 %v196, 0.044715
    %v207 = vmul.f32 %v203, %v185
    %v208 = vmul.f32 %v204, %v188
    %v209 = vmul.f32 %v205, %v193
    %v210 = vmul.f32 %v206, %v196
    %v211 = vmul.f32 %v207, %v185
    %v212 = vmul.f32 %v208, %v188
    %v213 = vmul.f32 %v209, %v193
    %v214 = vmul.f32 %v210, %v196
    %v215 = vadd.f32 %v185, %v211
    %v216 = vadd.f32 %v188, %v212
    %v217 = vadd.f32 %v193, %v213
    %v218 = vadd.f32 %v196, %v214
    %v219 = vmul.f32 %v215, 0.7978846
    %v220 = vmul.f32 %v216, 0.7978846
    %v221 = vmul.f32 %v217, 0.7978846
    %v222 = vmul.f32 %v218, 0.7978846
    %v223 = vtanh.pop %v219
    %v224 = vtanh.pop %v220
    %v225 = vtanh.pop %v221
    %v226 = vtanh.pop %v222
    %v227 = vadd.f32 %v223, 1.0
    %v228 = vadd.f32 %v224, 1.0
    %v229 = vadd.f32 %v225, 1.0
    %v230 = vadd.f32 %v226, 1.0
    %v231 = vmul.f32 %v199, %v227
    %v232 = vmul.f32 %v200, %v228
    %v233 = vmul.f32 %v201, %v229
    %v234 = vmul.f32 %v202, %v230
    %v235 = vpack.c.bf16 %v232, %v231
    %v236 = vpack.c.bf16 %v234, %v233
    %v237 = vld [vmem:[#allocation7] sm:$0xf]
    %v238 = vld [vmem:[#allocation7 + $0x4] sm:$0xf]
    %v239 = vld [vmem:[#allocation7 + $0x8] sm:$0xf]
    %v240 = vld [vmem:[#allocation7 + $0xc] sm:$0xf]
    %v241 = vld [vmem:[#allocation7 + $0x10] sm:$0xf]
    %v242 = vld [vmem:[#allocation7 + $0x14] sm:$0xf]
    %v243 = vld [vmem:[#allocation7 + $0x18] sm:$0xf]
    %v244 = vld [vmem:[#allocation7 + $0x1c] sm:$0xf]
    %v245 = vld [vmem:[#allocation7 + $0x20] sm:$0xf]
    %v246 = vld [vmem:[#allocation7 + $0x24] sm:$0xf]
    %v247 = vld [vmem:[#allocation7 + $0x28] sm:$0xf]
    %v248 = vld [vmem:[#allocation7 + $0x2c] sm:$0xf]
    %v249 = vld [vmem:[#allocation7 + $0x30] sm:$0xf]
    %v250 = vld [vmem:[#allocation7 + $0x34] sm:$0xf]
    %v251 = vld [vmem:[#allocation7 + $0x38] sm:$0xf]
    %v252 = vld [vmem:[#allocation7 + $0x3c] sm:$0xf]
    %v253 = vld [vmem:[%s4] sm:$0x1]
    %v255 = vlaneseq
    %v256 = vshrl.u32 %v255, 7
    %v257 = vsub.s32 0, %v256
    %v258 = vrot.slane %v253, %v257
    %v276 = vunpack.c.l.b16 %v237
    %v277 = vunpack.c.l.b16 %v238
    %v278 = vunpack.c.l.b16 %v239
    %v279 = vunpack.c.l.b16 %v240
    %v280 = vunpack.c.l.b16 %v241
    %v281 = vunpack.c.l.b16 %v242
    %v282 = vunpack.c.l.b16 %v243
    %v283 = vunpack.c.l.b16 %v244
    %v284 = vunpack.c.l.b16 %v245
    %v285 = vunpack.c.l.b16 %v246
    %v286 = vunpack.c.l.b16 %v247
    %v287 = vunpack.c.l.b16 %v248
    %v288 = vunpack.c.l.b16 %v249
    %v289 = vunpack.c.l.b16 %v250
    %v290 = vunpack.c.l.b16 %v251
    %v291 = vunpack.c.l.b16 %v252
    %v292 = vpack.c.b16 %v277, %v276
    %v293 = vpack.c.b16 %v279, %v278
    %v294 = vpack.c.b16 %v281, %v280
    %v295 = vpack.c.b16 %v283, %v282
    %v296 = vpack.c.b16 %v285, %v284
    %v297 = vpack.c.b16 %v287, %v286
    %v298 = vpack.c.b16 %v289, %v288
    %v299 = vpack.c.b16 %v291, %v290
    %308 = vmatprep.subr.bf16.mxu0 0
    %309 = vmatpush1.bf16.msra.mxu0 %v292
    %310 = vmatprep.subr.bf16.mxu0 0
    %311 = vmatpush1.bf16.msra.mxu0 %v293
    %312 = vmatprep.subr.bf16.mxu0 0
    %313 = vmatpush1.bf16.msra.mxu0 %v294
    %314 = vmatprep.subr.bf16.mxu0 0
    %315 = vmatpush1.bf16.msra.mxu0 %v295
    %316 = vmatprep.subr.bf16.mxu0 0
    %317 = vmatpush1.bf16.msra.mxu0 %v296
    %318 = vmatprep.subr.bf16.mxu0 0
    %319 = vmatpush1.bf16.msra.mxu0 %v297
    %320 = vmatprep.subr.bf16.mxu0 0
    %321 = vmatpush1.bf16.msra.mxu0 %v298
    %322 = vmatprep.subr.bf16.mxu0 0
    %323 = vmatpush1.bf16.msra.mxu0 %v299
    %324 = vmatprep.subr.bf16.mxu0 0
    %325 = vmatpush1.bf16.msra.mxu0 0
    %326 = vmatprep.subr.bf16.mxu0 0
    %327 = vmatpush1.bf16.msra.mxu0 0
    %328 = vmatprep.subr.bf16.mxu0 0
    %329 = vmatpush1.bf16.msra.mxu0 0
    %330 = vmatprep.subr.bf16.mxu0 0
    %331 = vmatpush1.bf16.msra.mxu0 0
    %332 = vmatprep.subr.bf16.mxu0 0
    %333 = vmatpush1.bf16.msra.mxu0 0
    %334 = vmatprep.subr.bf16.mxu0 0
    %335 = vmatpush1.bf16.msra.mxu0 0
    %336 = vmatprep.subr.bf16.mxu0 0
    %337 = vmatpush1.bf16.msra.mxu0 0
    %338 = vmatprep.subr.bf16.mxu0 0
    %339 = vmatpush1.bf16.msra.mxu0 0
    %340 = vmatprep.mubr.bf16.mxu0 0
    %341 = vmatmul.mubr.bf16.gmra.mrb[0].mxu0 %v235
    %v342 = vpop.f32.mrb[0].mxu0
    %v343 = vadd.f32 %v258, %v342
    %v344 = vpop.f32.mrb[0].mxu0
    %v345 = vpop.f32.mrb[0].mxu0
    %v346 = vadd.f32 %v258, %v345
    %v347 = vpop.f32.mrb[0].mxu0
    %348 = vmatprep.mubr.bf16.mxu0 0
    %349 = vmatmul.mubr.bf16.gmra.mrb[0].mxu0 %v236
    %v350 = vpop.f32.mrb[0].mxu0
    %v351 = vadd.f32 %v258, %v350
    %v352 = vpop.f32.mrb[0].mxu0
    %v353 = vpop.f32.mrb[0].mxu0
    %v354 = vadd.f32 %v258, %v353
    %v355 = vpop.f32.mrb[0].mxu0
    %356 = vdwg.mxu0
    %357 = vst [vmem:[#allocation8] sm:$0xff] %v343
    %358 = vst [vmem:[#allocation8 + $0x8] sm:$0xff] %v346
    %359 = vst [vmem:[#allocation8 + $0x10] sm:$0xff] %v351
    %360 = vst [vmem:[#allocation8 + $0x18] sm:$0xff] %v354
    // Predicated region
    $region34: #{tpu_custom_call.1} parent=1 // pred_check
      _
    $region35: #{tpu_custom_call.1} parent=1 // pred_check_branch
      %362 = sbr.rel (0) target = $region37
    $region36: #{tpu_custom_call.1} parent=1 // pred_region
      %s364 = ssub.s32 512, 512
      %365 = vsyncadd [#allocation4], %s364
      %s366 = sshll.u32 [#allocation8], 4
      %s367 = int_to_ptr.vmem [resolvable:$true] %s366
      %372 = dma.vmem_to_hbm [thread:$0]  %s367, 512, %s5, [#allocation4], 128, 128, 8
    $region37: #{tpu_custom_call.1} parent=1 // pred_fallthru
      _
    // Predicated region
    $region38: #{tpu_custom_call.1} parent=1 // pred_check
      _
    $region39: #{tpu_custom_call.1} parent=1 // pred_check_branch
      %374 = sbr.rel (0) target = $region41
    $region40: #{tpu_custom_call.1} parent=1 // pred_region
      %375 = dma.done [#allocation4], 512
    $region41: #{tpu_custom_call.1} parent=1 // pred_fallthru
      _
    %376 = vsyncpa [#allocation3], 1
    %377 = vsyncpa [#allocation6], 1
    %378 = vsyncpa [#allocation4], 1

</llo_original>
